<compile_context>
chip_gen: v6e
topology: v6e:2x2x1
jax: 0.10.0
libtpu: 0.0.40
codegen_flags: <defaults>
</compile_context>

<pallas_src>
import jax
import jax.numpy as jnp
from jax.experimental import pallas as pl
from jax.experimental.pallas import tpu as pltpu

_LANE = 128
_VMEM_LIMIT = 48 * 1024 * 1024  # < v7x's 64 MiB physical VMEM, with headroom.


def _round_up(x, m):
    return (x + m - 1) // m * m


# ----------------------------------------------------------------------------
# Kernels
# ----------------------------------------------------------------------------
def _gcn_agg_project_kernel(adj_ref, x_ref, wt_ref, b_ref, o_ref, acc_ref):
    """Accumulate A@X over the source axis; project + bias at the last step."""
    k = pl.program_id(1)

    @pl.when(k == 0)
    def _():
        acc_ref[...] = jnp.zeros_like(acc_ref)

    acc_ref[...] += jnp.dot(adj_ref[...], x_ref[...],
                            preferred_element_type=jnp.float32)

    @pl.when(k == pl.num_programs(1) - 1)
    def _():
        out = jnp.dot(acc_ref[...], wt_ref[...],
                      preferred_element_type=jnp.float32) + b_ref[...]
        o_ref[...] = out.astype(o_ref.dtype)


def _gcn_agg_bias_kernel(adj_ref, x_ref, b_ref, o_ref, acc_ref):
    """Accumulate A@(XW) over the source axis; add bias at the last step."""
    k = pl.program_id(1)

    @pl.when(k == 0)
    def _():
        acc_ref[...] = jnp.zeros_like(acc_ref)

    acc_ref[...] += jnp.dot(adj_ref[...], x_ref[...],
                            preferred_element_type=jnp.float32)

    @pl.when(k == pl.num_programs(1) - 1)
    def _():
        o_ref[...] = (acc_ref[...] + b_ref[...]).astype(o_ref.dtype)


def _project_kernel(x_ref, wt_ref, o_ref):
    """Row-tiled X @ W^T (no bias; bias is applied after aggregation)."""
    o_ref[...] = jnp.dot(x_ref[...], wt_ref[...],
                         preferred_element_type=jnp.float32).astype(o_ref.dtype)


# ----------------------------------------------------------------------------
# Wrappers
# ----------------------------------------------------------------------------
def _project(x_p, wt_p, tr):
    n_rows, f_in_p = x_p.shape
    f_out_p = wt_p.shape[1]
    return pl.pallas_call(
        _project_kernel,
        out_shape=jax.ShapeDtypeStruct((n_rows, f_out_p), jnp.bfloat16),
        grid=(n_rows // tr,),
        in_specs=[
            pl.BlockSpec((tr, f_in_p), lambda i: (i, 0)),
            pl.BlockSpec((f_in_p, f_out_p), lambda i: (0, 0)),
        ],
        out_specs=pl.BlockSpec((tr, f_out_p), lambda i: (i, 0)),
        compiler_params=pltpu.CompilerParams(
            dimension_semantics=("parallel",),
            vmem_limit_bytes=_VMEM_LIMIT),
    )(x_p, wt_p)


def gcn_layer(adj, feature, weight, bias, *, tm=512, tk=512):
    """adj: [N, N] (adj[v, u] = 1 iff edge u->v), feature: [N, F_in],
    weight: [F_out, F_in] (PyTorch nn.Linear layout), bias: [F_out]."""
    n, f_in = feature.shape
    f_out = weight.shape[0]
    assert adj.shape == (n, n)

    # Lane-dense padded sizes; tiles are clamped for small graphs.
    tm = min(tm, _round_up(n, _LANE))
    tk = min(tk, _round_up(n, _LANE))
    n_dst = _round_up(n, tm)
    n_src = _round_up(n, tk)
    f_in_p = _round_up(f_in, _LANE)
    f_out_p = _round_up(f_out, _LANE)

    # Pad + cast once on the host side.
    # bf16 is exact for 0/1 adjacency and works on every MXU generation
    # (v7x has no int8 path), and halves adjacency HBM traffic vs f32.
    adj_p = jnp.pad(adj.astype(jnp.bfloat16), ((0, n_dst - n), (0, n_src - n)))
    x_p = jnp.pad(feature.astype(jnp.bfloat16),
                  ((0, n_src - n), (0, f_in_p - f_in)))
    # Pre-transposed weight: [F_in_p, F_out_p] -> straight lane-major MXU feed.
    wt_p = jnp.pad(weight.T.astype(jnp.float32),
                   ((0, f_in_p - f_in), (0, f_out_p - f_out)))
    b_p = jnp.pad(bias.astype(jnp.float32), (0, f_out_p - f_out)).reshape(1, f_out_p)

    # Decision rule: aggregate over the narrower feature width.
    project_first = f_out_p < f_in_p
    if project_first:
        x_p = _project(x_p, wt_p, tr=tk)     # [n_src, f_out_p] bf16
        f_feat = f_out_p
    else:
        f_feat = f_in_p

    grid = (n_dst // tm, n_src // tk)

    flops = 2 * n_dst * n_src * f_feat
    bytes_accessed = (adj_p.size * 2 + n_src * f_feat * 2
                      + f_out_p * 4 + n_dst * f_out_p * 4)
    if not project_first:
        flops += 2 * n_dst * f_in_p * f_out_p
        bytes_accessed += f_in_p * f_out_p * 4
    cost = pl.CostEstimate(flops=int(flops), transcendentals=0,
                           bytes_accessed=int(bytes_accessed))

    if project_first:
        kernel = _gcn_agg_bias_kernel
        in_specs = [
            pl.BlockSpec((tm, tk), lambda i, k: (i, k)),
            pl.BlockSpec((tk, f_feat), lambda i, k: (k, 0)),
            pl.BlockSpec((1, f_out_p), lambda i, k: (0, 0)),
        ]
        args = (adj_p, x_p, b_p)
    else:
        kernel = _gcn_agg_project_kernel
        in_specs = [
            pl.BlockSpec((tm, tk), lambda i, k: (i, k)),
            pl.BlockSpec((tk, f_feat), lambda i, k: (k, 0)),
            pl.BlockSpec((f_in_p, f_out_p), lambda i, k: (0, 0)),
            pl.BlockSpec((1, f_out_p), lambda i, k: (0, 0)),
        ]
        args = (adj_p, x_p, wt_p, b_p)

    out_p = pl.pallas_call(
        kernel,
        out_shape=jax.ShapeDtypeStruct((n_dst, f_out_p), jnp.float32),
        grid=grid,
        in_specs=in_specs,
        out_specs=pl.BlockSpec((tm, f_out_p), lambda i, k: (i, 0)),
        scratch_shapes=[pltpu.VMEM((tm, f_feat), jnp.float32)],
        compiler_params=pltpu.CompilerParams(
            dimension_semantics=("parallel", "arbitrary"),
            vmem_limit_bytes=_VMEM_LIMIT),
        cost_estimate=cost,
    )(*args)

    return out_p[:n, :f_out]


# ----------------------------------------------------------------------------
# Test
# ----------------------------------------------------------------------------
if __name__ == "__main__":
    # ---- Case 1: F_in < F_out (aggregate-then-project path) ----
    N, F_IN, F_OUT = 16, 32, 64

    key = jax.random.PRNGKey(0)
    k_adj, k_feat, k_w, k_b = jax.random.split(key, 4)

    adj = (jax.random.uniform(k_adj, (N, N)) < 0.25).astype(jnp.float32)
    adj = jnp.maximum(adj, jnp.eye(N, dtype=jnp.float32))
    feature = jax.random.normal(k_feat, (N, F_IN), dtype=jnp.float32)

    bound = 1.0 / jnp.sqrt(jnp.float32(F_IN))
    weight = jax.random.uniform(k_w, (F_OUT, F_IN), minval=-bound, maxval=bound,
                                dtype=jnp.float32)
    bias = jax.random.uniform(k_b, (F_OUT,), minval=-bound, maxval=bound,
                              dtype=jnp.float32)

    out = jax.block_until_ready(gcn_layer(adj, feature, weight, bias))

    # Reference at matching input precision (features are fed to the MXU as bf16).
    feat_bf = feature.astype(jnp.bfloat16).astype(jnp.float32)
    ref = (adj @ feat_bf) @ weight.T + bias
    assert out.shape == (N, F_OUT)
    assert jnp.allclose(out, ref, atol=2e-3, rtol=2e-3), \
        float(jnp.max(jnp.abs(out - ref)))

    # ---- Case 2: F_out < F_in (project-first path) ----
    F_IN2, F_OUT2 = 256, 128
    k_f2, k_w2, k_b2 = jax.random.split(jax.random.PRNGKey(1), 3)
    feature2 = jax.random.normal(k_f2, (N, F_IN2), dtype=jnp.float32)
    bound2 = 1.0 / jnp.sqrt(jnp.float32(F_IN2))
    weight2 = jax.random.uniform(k_w2, (F_OUT2, F_IN2), minval=-bound2,
                                 maxval=bound2, dtype=jnp.float32)
    bias2 = jax.random.uniform(k_b2, (F_OUT2,), minval=-bound2, maxval=bound2,
                               dtype=jnp.float32)

    out2 = jax.block_until_ready(gcn_layer(adj, feature2, weight2, bias2))
    ref2 = (adj @ feature2) @ weight2.T + bias2
    assert out2.shape == (N, F_OUT2)
    assert jnp.allclose(out2, ref2, atol=5e-2, rtol=5e-2), \
        float(jnp.max(jnp.abs(out2 - ref2)))

    print("KERNEL_OK")
</pallas_src>

<mosaic_0001>
module attributes {stable_mosaic.version = 11 : i64} {
  func.func @_gcn_agg_project_kernel(%arg0: i32, %arg1: i32, %arg2: memref<128x128xbf16, #tpu.memory_space<vmem>>, %arg3: memref<128x128xbf16, #tpu.memory_space<vmem>>, %arg4: memref<128x128xf32, #tpu.memory_space<vmem>>, %arg5: memref<1x128xf32, #tpu.memory_space<vmem>>, %arg6: memref<128x128xf32, #tpu.memory_space<vmem>>, %arg7: memref<128x128xf32, #tpu.memory_space<vmem>>) attributes {dimension_semantics = [#tpu.dimension_semantics<parallel>, #tpu.dimension_semantics<arbitrary>], iteration_bounds = array<i64: 1, 1>, scalar_prefetch = 0 : i64, scratch_operands = 1 : i64, tpu.core_type = #tpu.core_type<tc>, window_params = [{transform_indices = @transform_0, window_bounds = array<i64: 128, 128>}, {transform_indices = @transform_1, window_bounds = array<i64: 128, 128>}, {pipeline_mode = #tpu.pipeline_mode<synchronous>, transform_indices = @transform_2, window_bounds = array<i64: 128, 128>}, {pipeline_mode = #tpu.pipeline_mode<synchronous>, transform_indices = @transform_3, window_bounds = array<i64: 1, 128>}, {transform_indices = @transform_4, window_bounds = array<i64: 128, 128>}]} {
    %c0_i32 = arith.constant 0 : i32
    %0 = arith.cmpi eq, %arg1, %c0_i32 : i32
    %1 = arith.extui %0 : i1 to i32
    %c0_i32_0 = arith.constant 0 : i32
    %2 = arith.cmpi ne, %1, %c0_i32_0 : i32
    scf.if %2 {
      %cst_10 = arith.constant 0.000000e+00 : f32
      %12 = vector.broadcast %cst_10 : f32 to vector<128x128xf32>
      %c0_11 = arith.constant 0 : index
      %c0_12 = arith.constant 0 : index
      %13 = vector.load %arg7[%c0_11, %c0_12] : memref<128x128xf32, #tpu.memory_space<vmem>>, vector<128x128xf32>
      tpu.vector_store %arg7[%c0_11, %c0_12], %12 {strides = array<i32>} : memref<128x128xf32, #tpu.memory_space<vmem>>, vector<128x128xf32>,
    } else {
    }
    %c0 = arith.constant 0 : index
    %c0_1 = arith.constant 0 : index
    %3 = vector.load %arg7[%c0, %c0_1] : memref<128x128xf32, #tpu.memory_space<vmem>>, vector<128x128xf32>
    %c0_2 = arith.constant 0 : index
    %c0_3 = arith.constant 0 : index
    %4 = vector.load %arg2[%c0_2, %c0_3] : memref<128x128xbf16, #tpu.memory_space<vmem>>, vector<128x128xbf16>
    %c0_4 = arith.constant 0 : index
    %c0_5 = arith.constant 0 : index
    %5 = vector.load %arg3[%c0_4, %c0_5] : memref<128x128xbf16, #tpu.memory_space<vmem>>, vector<128x128xbf16>
    %cst = arith.constant dense<0.000000e+00> : vector<128x128xf32>
    %6 = tpu.matmul %4, %5, %cst {dimension_numbers = #tpu.dot_dimension_numbers<[1], [0], [0], [1], [0, 0, 1, 1], [], []>} : vector<128x128xbf16>, vector<128x128xbf16>, vector<128x128xf32> -> vector<128x128xf32>
    %7 = arith.addf %3, %6 : vector<128x128xf32>
    %c0_6 = arith.constant 0 : index
    %c0_7 = arith.constant 0 : index
    %8 = vector.load %arg7[%c0_6, %c0_7] : memref<128x128xf32, #tpu.memory_space<vmem>>, vector<128x128xf32>
    tpu.vector_store %arg7[%c0_6, %c0_7], %7 {strides = array<i32>} : memref<128x128xf32, #tpu.memory_space<vmem>>, vector<128x128xf32>,
    %c0_i32_8 = arith.constant 0 : i32
    %9 = arith.cmpi eq, %arg1, %c0_i32_8 : i32
    %10 = arith.extui %9 : i1 to i32
    %c0_i32_9 = arith.constant 0 : i32
    %11 = arith.cmpi ne, %10, %c0_i32_9 : i32
    scf.if %11 {
      %c0_10 = arith.constant 0 : index
      %c0_11 = arith.constant 0 : index
      %12 = vector.load %arg7[%c0_10, %c0_11] : memref<128x128xf32, #tpu.memory_space<vmem>>, vector<128x128xf32>
      %c0_12 = arith.constant 0 : index
      %c0_13 = arith.constant 0 : index
      %13 = vector.load %arg4[%c0_12, %c0_13] : memref<128x128xf32, #tpu.memory_space<vmem>>, vector<128x128xf32>
      %cst_14 = arith.constant dense<0.000000e+00> : vector<128x128xf32>
      %14 = tpu.matmul %12, %13, %cst_14 {dimension_numbers = #tpu.dot_dimension_numbers<[1], [0], [0], [1], [0, 0, 1, 1], [], []>} : vector<128x128xf32>, vector<128x128xf32>, vector<128x128xf32> -> vector<128x128xf32>
      %c0_15 = arith.constant 0 : index
      %c0_16 = arith.constant 0 : index
      %15 = vector.load %arg5[%c0_15, %c0_16] : memref<1x128xf32, #tpu.memory_space<vmem>>, vector<1x128xf32>
      %16 = vector.broadcast %15 : vector<1x128xf32> to vector<128x128xf32>
      %17 = arith.addf %14, %16 : vector<128x128xf32>
      %c0_17 = arith.constant 0 : index
      %c0_18 = arith.constant 0 : index
      %18 = vector.load %arg6[%c0_17, %c0_18] : memref<128x128xf32, #tpu.memory_space<vmem>>, vector<128x128xf32>
      tpu.vector_store %arg6[%c0_17, %c0_18], %17 {strides = array<i32>} : memref<128x128xf32, #tpu.memory_space<vmem>>, vector<128x128xf32>,
    } else {
    }
    return
  }
  func.func @transform_0(%arg0: i32, %arg1: i32) -> (i32, i32) {
    %c0_i32 = arith.constant 0 : i32
    return %arg0, %arg1 : i32, i32
  }
  func.func @transform_1(%arg0: i32, %arg1: i32) -> (i32, i32) {
    %c0_i32 = arith.constant 0 : i32
    %c0_i32_0 = arith.constant 0 : i32
    return %arg1, %c0_i32 : i32, i32
  }
  func.func @transform_2(%arg0: i32, %arg1: i32) -> (i32, i32) {
    %c0_i32 = arith.constant 0 : i32
    %c0_i32_0 = arith.constant 0 : i32
    %c0_i32_1 = arith.constant 0 : i32
    return %c0_i32, %c0_i32_0 : i32, i32
  }
  func.func @transform_3(%arg0: i32, %arg1: i32) -> (i32, i32) {
    %c0_i32 = arith.constant 0 : i32
    %c0_i32_0 = arith.constant 0 : i32
    %c0_i32_1 = arith.constant 0 : i32
    return %c0_i32, %c0_i32_0 : i32, i32
  }
  func.func @transform_4(%arg0: i32, %arg1: i32) -> (i32, i32) {
    %c0_i32 = arith.constant 0 : i32
    %c0_i32_0 = arith.constant 0 : i32
    return %arg0, %c0_i32 : i32, i32
  }
}

</mosaic_0001>

<llo_original>
// kernel: tpu_custom_call.1
$region0: #{tpu_custom_call.1}
  #allocation0 [shape = 'u32[]', space=smem, size = 0x4, offset = 0x4, fixed_abs, tag = 'smem constant byte address 0x4 - core index']
  #allocation1 [shape = 'u32[144,128]{1,0:T(1,128)}', space=vmem, size = 0x12000, scoped, tag = 'internal scratch']
  #allocation2 [shape = 'f32[128,128]{1,0:T(8,128)}', space=vmem, size = 0x10000, scoped, tag = 'scratch operand']
  %s0 = inlined_call_operand.hbm [shape: bf16[128,128], index: 0, kind: input, shape index: {}]
  %s1 = inlined_call_operand.hbm [shape: bf16[128,128], index: 1, kind: input, shape index: {}]
  %s2 = inlined_call_operand.hbm [shape: f32[128,128], index: 2, kind: input, shape index: {}]
  %s3 = inlined_call_operand.vmem [shape: f32[1,128], index: 3, kind: input, shape index: {}]
  %s4 = inlined_call_operand.hbm [shape: f32[128,128], index: 4, kind: output, shape index: {}]
  %s5 = sld [smem:[#allocation0]]
  $region46: #{tpu_custom_call.1} parent=0
    _
  %s7 = ssub.s32 1, %s5
  %s8 = scalar_select 0, %s7, %s5
  $region1: #{tpu_custom_call.1} parent=0
    #allocation3 [shape = 'u8[32768]{0}', space=vmem, size = 0x8000, scoped, tag = 'input window, operand 0, single buffered']
    #allocation4 [shape = 's32[1]{0}', space=sflag, size = 0x4, scoped, tag = 'scoped memory for tpu_custom_call.1']
    #allocation5 [shape = 's32[1]{0}', space=sflag, size = 0x4, scoped, tag = 'scoped memory for tpu_custom_call.1']
    #allocation6 [shape = 'u8[32768]{0}', space=vmem, size = 0x8000, scoped, tag = 'input window, operand 1, single buffered']
    #allocation7 [shape = 's32[1]{0}', space=sflag, size = 0x4, scoped, tag = 'scoped memory for tpu_custom_call.1']
    #allocation8 [shape = 'u8[65536]{0}', space=vmem, size = 0x10000, scoped, tag = 'input window, operand 2, single buffered']
    #allocation9 [shape = 'u8[65536]{0}', space=vmem, size = 0x10000, scoped, tag = 'output window, operand 0, single buffered']
    %9 = vsyncpa [#allocation4], 0
    %10 = vsyncpa [#allocation7], 0
    %11 = vsyncpa [#allocation5], 0
    // Predicated region
    $region2: #{tpu_custom_call.1} parent=1 // pred_check
      _
    $region3: #{tpu_custom_call.1} parent=1 // pred_check_branch
      %13 = sbr.rel (0) target = $region5
    $region4: #{tpu_custom_call.1} parent=1 // pred_region
      %s15 = ssub.s32 1024, 1024
      %16 = vsyncadd [#allocation4], %s15
      %s17 = sshll.u32 [#allocation3], 4
      %s18 = int_to_ptr.vmem [resolvable:$true] %s17
      %23 = dma.hbm_to_vmem [thread:$0]  %s0, 1024, %s18, [#allocation4], 64, 64, 4
    $region5: #{tpu_custom_call.1} parent=1 // pred_fallthru
      _
    // Predicated region
    $region6: #{tpu_custom_call.1} parent=1 // pred_check
      _
    $region7: #{tpu_custom_call.1} parent=1 // pred_check_branch
      %25 = sbr.rel (0) target = $region9
    $region8: #{tpu_custom_call.1} parent=1 // pred_region
      %s27 = ssub.s32 1024, 1024
      %28 = vsyncadd [#allocation7], %s27
      %s29 = sshll.u32 [#allocation6], 4
      %s30 = int_to_ptr.vmem [resolvable:$true] %s29
      %35 = dma.hbm_to_vmem [thread:$0]  %s1, 1024, %s30, [#allocation7], 64, 64, 4
    $region9: #{tpu_custom_call.1} parent=1 // pred_fallthru
      _
    // Predicated region
    $region10: #{tpu_custom_call.1} parent=1 // pred_check
      _
    $region11: #{tpu_custom_call.1} parent=1 // pred_check_branch
      %37 = sbr.rel (0) target = $region13
    $region12: #{tpu_custom_call.1} parent=1 // pred_region
      %s39 = ssub.s32 2048, 2048
      %40 = vsyncadd [#allocation7], %s39
      %s41 = sshll.u32 [#allocation8], 4
      %s42 = int_to_ptr.vmem [resolvable:$true] %s41
      %47 = dma.hbm_to_vmem [thread:$0]  %s2, 2048, %s42, [#allocation7], 128, 128, 8
    $region13: #{tpu_custom_call.1} parent=1 // pred_fallthru
      _
    // Predicated region
    $region14: #{tpu_custom_call.1} parent=1 // pred_check
      _
    $region15: #{tpu_custom_call.1} parent=1 // pred_check_branch
      %49 = sbr.rel (0) target = $region17
    $region16: #{tpu_custom_call.1} parent=1 // pred_region
      _
    $region17: #{tpu_custom_call.1} parent=1 // pred_fallthru
      _
    // Predicated region
    $region18: #{tpu_custom_call.1} parent=1 // pred_check
      _
    $region19: #{tpu_custom_call.1} parent=1 // pred_check_branch
      %51 = sbr.rel (0) target = $region21
    $region20: #{tpu_custom_call.1} parent=1 // pred_region
      %52 = dma.done [#allocation4], 1024
    $region21: #{tpu_custom_call.1} parent=1 // pred_fallthru
      _
    // Predicated region
    $region22: #{tpu_custom_call.1} parent=1 // pred_check
      _
    $region23: #{tpu_custom_call.1} parent=1 // pred_check_branch
      %54 = sbr.rel (0) target = $region25
    $region24: #{tpu_custom_call.1} parent=1 // pred_region
      %55 = dma.done [#allocation7], 1024
    $region25: #{tpu_custom_call.1} parent=1 // pred_fallthru
      _
    // Predicated region
    $region26: #{tpu_custom_call.1} parent=1 // pred_check
      _
    $region27: #{tpu_custom_call.1} parent=1 // pred_check_branch
      %57 = sbr.rel (0) target = $region29
    $region28: #{tpu_custom_call.1} parent=1 // pred_region
      %58 = dma.done [#allocation7], 2048
    $region29: #{tpu_custom_call.1} parent=1 // pred_fallthru
      _
    %p60 = scmp.eq.s32.totalorder 0, 0
    // Predicated region
    $region30: #{tpu_custom_call.1} parent=1 // pred_check
      %p61 = pneg %p60
    $region31: #{tpu_custom_call.1} parent=1 // pred_check_branch
      %63 = sbr.rel (%p61) target = $region33
    $region32: #{tpu_custom_call.1} parent=1 // pred_region
      %64 = vst [vmem:[#allocation2] sm:$0xff] 0.0
      %65 = vst [vmem:[#allocation2 + $0x8] sm:$0xff] 0.0
      %66 = vst [vmem:[#allocation2 + $0x10] sm:$0xff] 0.0
      %67 = vst [vmem:[#allocation2 + $0x18] sm:$0xff] 0.0
      %68 = vst [vmem:[#allocation2 + $0x20] sm:$0xff] 0.0
      %69 = vst [vmem:[#allocation2 + $0x28] sm:$0xff] 0.0
      %70 = vst [vmem:[#allocation2 + $0x30] sm:$0xff] 0.0
      %71 = vst [vmem:[#allocation2 + $0x38] sm:$0xff] 0.0
      %72 = vst [vmem:[#allocation2 + $0x40] sm:$0xff] 0.0
      %73 = vst [vmem:[#allocation2 + $0x48] sm:$0xff] 0.0
      %74 = vst [vmem:[#allocation2 + $0x50] sm:$0xff] 0.0
      %75 = vst [vmem:[#allocation2 + $0x58] sm:$0xff] 0.0
      %76 = vst [vmem:[#allocation2 + $0x60] sm:$0xff] 0.0
      %77 = vst [vmem:[#allocation2 + $0x68] sm:$0xff] 0.0
      %78 = vst [vmem:[#allocation2 + $0x70] sm:$0xff] 0.0
      %79 = vst [vmem:[#allocation2 + $0x78] sm:$0xff] 0.0
    $region33: #{tpu_custom_call.1} parent=1 // pred_fallthru
      _
    %v80 = vld [vmem:[#allocation2] sm:$0xff]
    %v81 = vld [vmem:[#allocation2 + $0x8] sm:$0xff]
    %v82 = vld [vmem:[#allocation2 + $0x10] sm:$0xff]
    %v83 = vld [vmem:[#allocation2 + $0x18] sm:$0xff]
    %v84 = vld [vmem:[#allocation2 + $0x20] sm:$0xff]
    %v85 = vld [vmem:[#allocation2 + $0x28] sm:$0xff]
    %v86 = vld [vmem:[#allocation2 + $0x30] sm:$0xff]
    %v87 = vld [vmem:[#allocation2 + $0x38] sm:$0xff]
    %v88 = vld [vmem:[#allocation2 + $0x40] sm:$0xff]
    %v89 = vld [vmem:[#allocation2 + $0x48] sm:$0xff]
    %v90 = vld [vmem:[#allocation2 + $0x50] sm:$0xff]
    %v91 = vld [vmem:[#allocation2 + $0x58] sm:$0xff]
    %v92 = vld [vmem:[#allocation2 + $0x60] sm:$0xff]
    %v93 = vld [vmem:[#allocation2 + $0x68] sm:$0xff]
    %v94 = vld [vmem:[#allocation2 + $0x70] sm:$0xff]
    %v95 = vld [vmem:[#allocation2 + $0x78] sm:$0xff]
    %v96 = vld [vmem:[#allocation3] sm:$0xf]
    %v97 = vld [vmem:[#allocation3 + $0x4] sm:$0xf]
    %v98 = vld [vmem:[#allocation3 + $0x8] sm:$0xf]
    %v99 = vld [vmem:[#allocation3 + $0xc] sm:$0xf]
    %v100 = vld [vmem:[#allocation3 + $0x10] sm:$0xf]
    %v101 = vld [vmem:[#allocation3 + $0x14] sm:$0xf]
    %v102 = vld [vmem:[#allocation3 + $0x18] sm:$0xf]
    %v103 = vld [vmem:[#allocation3 + $0x1c] sm:$0xf]
    %v104 = vld [vmem:[#allocation3 + $0x20] sm:$0xf]
    %v105 = vld [vmem:[#allocation3 + $0x24] sm:$0xf]
    %v106 = vld [vmem:[#allocation3 + $0x28] sm:$0xf]
    %v107 = vld [vmem:[#allocation3 + $0x2c] sm:$0xf]
    %v108 = vld [vmem:[#allocation3 + $0x30] sm:$0xf]
    %v109 = vld [vmem:[#allocation3 + $0x34] sm:$0xf]
    %v110 = vld [vmem:[#allocation3 + $0x38] sm:$0xf]
    %v111 = vld [vmem:[#allocation3 + $0x3c] sm:$0xf]
    %v112 = vld [vmem:[#allocation6] sm:$0xf]
    %v113 = vld [vmem:[#allocation6 + $0x4] sm:$0xf]
    %v114 = vld [vmem:[#allocation6 + $0x8] sm:$0xf]
    %v115 = vld [vmem:[#allocation6 + $0xc] sm:$0xf]
    %v116 = vld [vmem:[#allocation6 + $0x10] sm:$0xf]
    %v117 = vld [vmem:[#allocation6 + $0x14] sm:$0xf]
    %v118 = vld [vmem:[#allocation6 + $0x18] sm:$0xf]
    %v119 = vld [vmem:[#allocation6 + $0x1c] sm:$0xf]
    %v120 = vld [vmem:[#allocation6 + $0x20] sm:$0xf]
    %v121 = vld [vmem:[#allocation6 + $0x24] sm:$0xf]
    %v122 = vld [vmem:[#allocation6 + $0x28] sm:$0xf]
    %v123 = vld [vmem:[#allocation6 + $0x2c] sm:$0xf]
    %v124 = vld [vmem:[#allocation6 + $0x30] sm:$0xf]
    %v125 = vld [vmem:[#allocation6 + $0x34] sm:$0xf]
    %v126 = vld [vmem:[#allocation6 + $0x38] sm:$0xf]
    %v127 = vld [vmem:[#allocation6 + $0x3c] sm:$0xf]
    %v144 = vunpack.c.l.b16 %v96
    %v145 = vunpack.c.l.b16 %v97
    %v146 = vunpack.c.l.b16 %v98
    %v147 = vunpack.c.l.b16 %v99
    %v148 = vunpack.c.l.b16 %v100
    %v149 = vunpack.c.l.b16 %v101
    %v150 = vunpack.c.l.b16 %v102
    %v151 = vunpack.c.l.b16 %v103
    %v152 = vunpack.c.l.b16 %v104
    %v153 = vunpack.c.l.b16 %v105
    %v154 = vunpack.c.l.b16 %v106
    %v155 = vunpack.c.l.b16 %v107
    %v156 = vunpack.c.l.b16 %v108
    %v157 = vunpack.c.l.b16 %v109
    %v158 = vunpack.c.l.b16 %v110
    %v159 = vunpack.c.l.b16 %v111
    %v160 = vpack.c.b16 %v145, %v144
    %v161 = vpack.c.b16 %v147, %v146
    %v162 = vpack.c.b16 %v149, %v148
    %v163 = vpack.c.b16 %v151, %v150
    %v164 = vpack.c.b16 %v153, %v152
    %v165 = vpack.c.b16 %v155, %v154
    %v166 = vpack.c.b16 %v157, %v156
    %v167 = vpack.c.b16 %v159, %v158
    %v192 = vunpack.c.l.b16 %v112
    %v193 = vunpack.c.l.b16 %v113
    %v194 = vunpack.c.l.b16 %v114
    %v195 = vunpack.c.l.b16 %v115
    %v196 = vunpack.c.l.b16 %v116
    %v197 = vunpack.c.l.b16 %v117
    %v198 = vunpack.c.l.b16 %v118
    %v199 = vunpack.c.l.b16 %v119
    %v200 = vunpack.c.l.b16 %v120
    %v201 = vunpack.c.l.b16 %v121
    %v202 = vunpack.c.l.b16 %v122
    %v203 = vunpack.c.l.b16 %v123
    %v204 = vunpack.c.l.b16 %v124
    %v205 = vunpack.c.l.b16 %v125
    %v206 = vunpack.c.l.b16 %v126
    %v207 = vunpack.c.l.b16 %v127
    %v208 = vpack.c.b16 %v193, %v192
    %v209 = vpack.c.b16 %v195, %v194
    %v210 = vpack.c.b16 %v197, %v196
    %v211 = vpack.c.b16 %v199, %v198
    %v212 = vpack.c.b16 %v201, %v200
    %v213 = vpack.c.b16 %v203, %v202
    %v214 = vpack.c.b16 %v205, %v204
    %v215 = vpack.c.b16 %v207, %v206
    %224 = vmatprep.subr.bf16.mxu0 0
    %225 = vmatpush1.bf16.msra.mxu0 %v215
    %226 = vmatprep.subr.bf16.mxu0 0
    %227 = vmatpush1.bf16.msra.mxu0 %v214
    %228 = vmatprep.subr.bf16.mxu0 0
    %229 = vmatpush1.bf16.msra.mxu0 %v213
    %230 = vmatprep.subr.bf16.mxu0 0
    %231 = vmatpush1.bf16.msra.mxu0 %v212
    %232 = vmatprep.subr.bf16.mxu0 0
    %233 = vmatpush1.bf16.msra.mxu0 %v211
    %234 = vmatprep.subr.bf16.mxu0 0
    %235 = vmatpush1.bf16.msra.mxu0 %v210
    %236 = vmatprep.subr.bf16.mxu0 0
    %237 = vmatpush1.bf16.msra.mxu0 %v209
    %238 = vmatprep.subr.bf16.mxu0 0
    %239 = vmatpush1.bf16.msra.mxu0 %v208
    %240 = vmatprep.subr.bf16.mxu0 0
    %241 = vmatpush2.bf16.msra.mxu0 0
    %242 = vmatprep.subr.bf16.mxu0 0
    %243 = vmatpush2.bf16.msra.mxu0 0
    %244 = vmatprep.subr.bf16.mxu0 0
    %245 = vmatpush2.bf16.msra.mxu0 0
    %246 = vmatprep.subr.bf16.mxu0 0
    %247 = vmatpush2.bf16.msra.mxu0 0
    %248 = vmatprep.subr.bf16.mxu0 0
    %249 = vmatpush2.bf16.msra.mxu0 0
    %250 = vmatprep.subr.bf16.mxu0 0
    %251 = vmatpush2.bf16.msra.mxu0 0
    %252 = vmatprep.subr.bf16.mxu0 0
    %253 = vmatpush2.bf16.msra.mxu0 0
    %254 = vmatprep.subr.bf16.mxu0 0
    %255 = vmatpush2.bf16.msra.mxu0 0
    %256 = vmatprep.mubr.bf16.mxu0 0
    %257 = vmatmul.mubr.bf16.gmra.mxu0 %v160
    %v258 = vpop.f32.mrf.mxu0
    %v259 = vadd.f32 0.0, %v258
    %v260 = vpop.f32.mrf.mxu0
    %v261 = vpop.f32.mrf.mxu0
    %v262 = vadd.f32 0.0, %v261
    %v263 = vpop.f32.mrf.mxu0
    %264 = vmatprep.mubr.bf16.mxu0 0
    %265 = vmatmul.mubr.bf16.gmra.mxu0 %v161
    %v266 = vpop.f32.mrf.mxu0
    %v267 = vadd.f32 0.0, %v266
    %v268 = vpop.f32.mrf.mxu0
    %v269 = vpop.f32.mrf.mxu0
    %v270 = vadd.f32 0.0, %v269
    %v271 = vpop.f32.mrf.mxu0
    %272 = vmatprep.mubr.bf16.mxu0 0
    %273 = vmatmul.mubr.bf16.gmra.mxu0 %v162
    %v274 = vpop.f32.mrf.mxu0
    %v275 = vadd.f32 0.0, %v274
    %v276 = vpop.f32.mrf.mxu0
    %v277 = vpop.f32.mrf.mxu0
    %v278 = vadd.f32 0.0, %v277
    %v279 = vpop.f32.mrf.mxu0
    %280 = vmatprep.mubr.bf16.mxu0 0
    %281 = vmatmul.mubr.bf16.gmra.mxu0 %v163
    %v282 = vpop.f32.mrf.mxu0
    %v283 = vadd.f32 0.0, %v282
    %v284 = vpop.f32.mrf.mxu0
    %v285 = vpop.f32.mrf.mxu0
    %v286 = vadd.f32 0.0, %v285
    %v287 = vpop.f32.mrf.mxu0
    %288 = vmatprep.mubr.bf16.mxu0 0
    %289 = vmatmul.mubr.bf16.gmra.mxu0 %v164
    %v290 = vpop.f32.mrf.mxu0
    %v291 = vadd.f32 0.0, %v290
    %v292 = vpop.f32.mrf.mxu0
    %v293 = vpop.f32.mrf.mxu0
    %v294 = vadd.f32 0.0, %v293
    %v295 = vpop.f32.mrf.mxu0
    %296 = vmatprep.mubr.bf16.mxu0 0
    %297 = vmatmul.mubr.bf16.gmra.mxu0 %v165
    %v298 = vpop.f32.mrf.mxu0
    %v299 = vadd.f32 0.0, %v298
    %v300 = vpop.f32.mrf.mxu0
    %v301 = vpop.f32.mrf.mxu0
    %v302 = vadd.f32 0.0, %v301
    %v303 = vpop.f32.mrf.mxu0
    %304 = vmatprep.mubr.bf16.mxu0 0
    %305 = vmatmul.mubr.bf16.gmra.mxu0 %v166
    %v306 = vpop.f32.mrf.mxu0
    %v307 = vadd.f32 0.0, %v306
    %v308 = vpop.f32.mrf.mxu0
    %v309 = vpop.f32.mrf.mxu0
    %v310 = vadd.f32 0.0, %v309
    %v311 = vpop.f32.mrf.mxu0
    %312 = vmatprep.mubr.bf16.mxu0 0
    %313 = vmatmul.mubr.bf16.gmra.mxu0 %v167
    %v314 = vpop.f32.mrf.mxu0
    %v315 = vadd.f32 0.0, %v314
    %v316 = vpop.f32.mrf.mxu0
    %v317 = vpop.f32.mrf.mxu0
    %v318 = vadd.f32 0.0, %v317
    %v319 = vpop.f32.mrf.mxu0
    %320 = vdwg.mxu0
    %v321 = vadd.f32 %v80, %v259
    %v322 = vadd.f32 %v81, %v262
    %v323 = vadd.f32 %v82, %v267
    %v324 = vadd.f32 %v83, %v270
    %v325 = vadd.f32 %v84, %v275
    %v326 = vadd.f32 %v85, %v278
    %v327 = vadd.f32 %v86, %v283
    %v328 = vadd.f32 %v87, %v286
    %v329 = vadd.f32 %v88, %v291
    %v330 = vadd.f32 %v89, %v294
    %v331 = vadd.f32 %v90, %v299
    %v332 = vadd.f32 %v91, %v302
    %v333 = vadd.f32 %v92, %v307
    %v334 = vadd.f32 %v93, %v310
    %v335 = vadd.f32 %v94, %v315
    %v336 = vadd.f32 %v95, %v318
    %337 = vst [vmem:[#allocation2] sm:$0xff] %v321
    %338 = vst [vmem:[#allocation2 + $0x8] sm:$0xff] %v322
    %339 = vst [vmem:[#allocation2 + $0x10] sm:$0xff] %v323
    %340 = vst [vmem:[#allocation2 + $0x18] sm:$0xff] %v324
    %341 = vst [vmem:[#allocation2 + $0x20] sm:$0xff] %v325
    %342 = vst [vmem:[#allocation2 + $0x28] sm:$0xff] %v326
    %343 = vst [vmem:[#allocation2 + $0x30] sm:$0xff] %v327
    %344 = vst [vmem:[#allocation2 + $0x38] sm:$0xff] %v328
    %345 = vst [vmem:[#allocation2 + $0x40] sm:$0xff] %v329
    %346 = vst [vmem:[#allocation2 + $0x48] sm:$0xff] %v330
    %347 = vst [vmem:[#allocation2 + $0x50] sm:$0xff] %v331
    %348 = vst [vmem:[#allocation2 + $0x58] sm:$0xff] %v332
    %349 = vst [vmem:[#allocation2 + $0x60] sm:$0xff] %v333
    %350 = vst [vmem:[#allocation2 + $0x68] sm:$0xff] %v334
    %351 = vst [vmem:[#allocation2 + $0x70] sm:$0xff] %v335
    %352 = vst [vmem:[#allocation2 + $0x78] sm:$0xff] %v336
    // Predicated region
    $region34: #{tpu_custom_call.1} parent=1 // pred_check
      %p353 = pneg %p60
    $region35: #{tpu_custom_call.1} parent=1 // pred_check_branch
      %355 = sbr.rel (%p353) target = $region37
    $region36: #{tpu_custom_call.1} parent=1 // pred_region
      %v356 = vld [vmem:[#allocation2] sm:$0xff]
      %v357 = vld [vmem:[#allocation2 + $0x8] sm:$0xff]
      %v358 = vld [vmem:[#allocation2 + $0x10] sm:$0xff]
      %v359 = vld [vmem:[#allocation2 + $0x18] sm:$0xff]
      %v360 = vld [vmem:[#allocation2 + $0x20] sm:$0xff]
      %v361 = vld [vmem:[#allocation2 + $0x28] sm:$0xff]
      %v362 = vld [vmem:[#allocation2 + $0x30] sm:$0xff]
      %v363 = vld [vmem:[#allocation2 + $0x38] sm:$0xff]
      %v364 = vld [vmem:[#allocation2 + $0x40] sm:$0xff]
      %v365 = vld [vmem:[#allocation2 + $0x48] sm:$0xff]
      %v366 = vld [vmem:[#allocation2 + $0x50] sm:$0xff]
      %v367 = vld [vmem:[#allocation2 + $0x58] sm:$0xff]
      %v368 = vld [vmem:[#allocation2 + $0x60] sm:$0xff]
      %v369 = vld [vmem:[#allocation2 + $0x68] sm:$0xff]
      %v370 = vld [vmem:[#allocation2 + $0x70] sm:$0xff]
      %v371 = vld [vmem:[#allocation2 + $0x78] sm:$0xff]
      %v372 = vld [vmem:[#allocation8] sm:$0xff]
      %v373 = vld [vmem:[#allocation8 + $0x8] sm:$0xff]
      %v374 = vld [vmem:[#allocation8 + $0x10] sm:$0xff]
      %v375 = vld [vmem:[#allocation8 + $0x18] sm:$0xff]
      %v376 = vld [vmem:[#allocation8 + $0x20] sm:$0xff]
      %v377 = vld [vmem:[#allocation8 + $0x28] sm:$0xff]
      %v378 = vld [vmem:[#allocation8 + $0x30] sm:$0xff]
      %v379 = vld [vmem:[#allocation8 + $0x38] sm:$0xff]
      %v380 = vld [vmem:[#allocation8 + $0x40] sm:$0xff]
      %v381 = vld [vmem:[#allocation8 + $0x48] sm:$0xff]
      %v382 = vld [vmem:[#allocation8 + $0x50] sm:$0xff]
      %v383 = vld [vmem:[#allocation8 + $0x58] sm:$0xff]
      %v384 = vld [vmem:[#allocation8 + $0x60] sm:$0xff]
      %v385 = vld [vmem:[#allocation8 + $0x68] sm:$0xff]
      %v386 = vld [vmem:[#allocation8 + $0x70] sm:$0xff]
      %v387 = vld [vmem:[#allocation8 + $0x78] sm:$0xff]
      %v388 = vld [vmem:[%s3] sm:$0x1]
      %v390 = vlaneseq
      %v391 = vshrl.u32 %v390, 7
      %v392 = vsub.s32 0, %v391
      %v393 = vrot.slane %v388, %v392
      %395 = vmatprep.subr.mxu0 0.0
      %396 = vmatpush1.msra.mxu0 %v387
      %397 = vmatprep.subr.mxu0 0.0
      %398 = vmatpush1.msra.mxu0 %v386
      %399 = vmatprep.subr.mxu0 0.0
      %400 = vmatpush1.msra.mxu0 %v385
      %401 = vmatprep.subr.mxu0 0.0
      %402 = vmatpush1.msra.mxu0 %v384
      %403 = vmatprep.subr.mxu0 0.0
      %404 = vmatpush1.msra.mxu0 %v383
      %405 = vmatprep.subr.mxu0 0.0
      %406 = vmatpush1.msra.mxu0 %v382
      %407 = vmatprep.subr.mxu0 0.0
      %408 = vmatpush1.msra.mxu0 %v381
      %409 = vmatprep.subr.mxu0 0.0
      %410 = vmatpush1.msra.mxu0 %v380
      %411 = vmatprep.subr.mxu0 0.0
      %412 = vmatpush1.msra.mxu0 %v379
      %413 = vmatprep.subr.mxu0 0.0
      %414 = vmatpush1.msra.mxu0 %v378
      %415 = vmatprep.subr.mxu0 0.0
      %416 = vmatpush1.msra.mxu0 %v377
      %417 = vmatprep.subr.mxu0 0.0
      %418 = vmatpush1.msra.mxu0 %v376
      %419 = vmatprep.subr.mxu0 0.0
      %420 = vmatpush1.msra.mxu0 %v375
      %421 = vmatprep.subr.mxu0 0.0
      %422 = vmatpush1.msra.mxu0 %v374
      %423 = vmatprep.subr.mxu0 0.0
      %424 = vmatpush1.msra.mxu0 %v373
      %425 = vmatprep.subr.mxu0 0.0
      %426 = vmatpush1.msra.mxu0 %v372
      %427 = vmatprep.subr.mxu0 0.0
      %428 = vmatpush2.msra.mxu0 0.0
      %429 = vmatprep.subr.mxu0 0.0
      %430 = vmatpush2.msra.mxu0 0.0
      %431 = vmatprep.subr.mxu0 0.0
      %432 = vmatpush2.msra.mxu0 0.0
      %433 = vmatprep.subr.mxu0 0.0
      %434 = vmatpush2.msra.mxu0 0.0
      %435 = vmatprep.subr.mxu0 0.0
      %436 = vmatpush2.msra.mxu0 0.0
      %437 = vmatprep.subr.mxu0 0.0
      %438 = vmatpush2.msra.mxu0 0.0
      %439 = vmatprep.subr.mxu0 0.0
      %440 = vmatpush2.msra.mxu0 0.0
      %441 = vmatprep.subr.mxu0 0.0
      %442 = vmatpush2.msra.mxu0 0.0
      %443 = vmatprep.subr.mxu0 0.0
      %444 = vmatpush2.msra.mxu0 0.0
      %445 = vmatprep.subr.mxu0 0.0
      %446 = vmatpush2.msra.mxu0 0.0
      %447 = vmatprep.subr.mxu0 0.0
      %448 = vmatpush2.msra.mxu0 0.0
      %449 = vmatprep.subr.mxu0 0.0
      %450 = vmatpush2.msra.mxu0 0.0
      %451 = vmatprep.subr.mxu0 0.0
      %452 = vmatpush2.msra.mxu0 0.0
      %453 = vmatprep.subr.mxu0 0.0
      %454 = vmatpush2.msra.mxu0 0.0
      %455 = vmatprep.subr.mxu0 0.0
      %456 = vmatpush2.msra.mxu0 0.0
      %457 = vmatprep.subr.mxu0 0.0
      %458 = vmatpush2.msra.mxu0 0.0
      %459 = vmatprep.mubr.f32.mxu0 0.0
      %460 = vmatmul.mubr.f32.gmra.mxu0 %v356
      %v461 = vpop.f32.mrf.mxu0
      %v462 = vadd.f32 %v393, %v461
      %v463 = vpop.f32.mrf.mxu0
      %464 = vmatprep.mubr.f32.mxu0 0.0
      %465 = vmatmul.mubr.f32.gmra.mxu0 %v357
      %v466 = vpop.f32.mrf.mxu0
      %v467 = vadd.f32 %v393, %v466
      %v468 = vpop.f32.mrf.mxu0
      %469 = vmatprep.mubr.f32.mxu0 0.0
      %470 = vmatmul.mubr.f32.gmra.mxu0 %v358
      %v471 = vpop.f32.mrf.mxu0
      %v472 = vadd.f32 %v393, %v471
      %v473 = vpop.f32.mrf.mxu0
      %474 = vmatprep.mubr.f32.mxu0 0.0
      %475 = vmatmul.mubr.f32.gmra.mxu0 %v359
      %v476 = vpop.f32.mrf.mxu0
      %v477 = vadd.f32 %v393, %v476
      %v478 = vpop.f32.mrf.mxu0
      %479 = vmatprep.mubr.f32.mxu0 0.0
      %480 = vmatmul.mubr.f32.gmra.mxu0 %v360
      %v481 = vpop.f32.mrf.mxu0
      %v482 = vadd.f32 %v393, %v481
      %v483 = vpop.f32.mrf.mxu0
      %484 = vmatprep.mubr.f32.mxu0 0.0
      %485 = vmatmul.mubr.f32.gmra.mxu0 %v361
      %v486 = vpop.f32.mrf.mxu0
      %v487 = vadd.f32 %v393, %v486
      %v488 = vpop.f32.mrf.mxu0
      %489 = vmatprep.mubr.f32.mxu0 0.0
      %490 = vmatmul.mubr.f32.gmra.mxu0 %v362
      %v491 = vpop.f32.mrf.mxu0
      %v492 = vadd.f32 %v393, %v491
      %v493 = vpop.f32.mrf.mxu0
      %494 = vmatprep.mubr.f32.mxu0 0.0
      %495 = vmatmul.mubr.f32.gmra.mxu0 %v363
      %v496 = vpop.f32.mrf.mxu0
      %v497 = vadd.f32 %v393, %v496
      %v498 = vpop.f32.mrf.mxu0
      %499 = vmatprep.mubr.f32.mxu0 0.0
      %500 = vmatmul.mubr.f32.gmra.mxu0 %v364
      %v501 = vpop.f32.mrf.mxu0
      %v502 = vadd.f32 %v393, %v501
      %v503 = vpop.f32.mrf.mxu0
      %504 = vmatprep.mubr.f32.mxu0 0.0
      %505 = vmatmul.mubr.f32.gmra.mxu0 %v365
      %v506 = vpop.f32.mrf.mxu0
      %v507 = vadd.f32 %v393, %v506
      %v508 = vpop.f32.mrf.mxu0
      %509 = vmatprep.mubr.f32.mxu0 0.0
      %510 = vmatmul.mubr.f32.gmra.mxu0 %v366
      %v511 = vpop.f32.mrf.mxu0
      %v512 = vadd.f32 %v393, %v511
      %v513 = vpop.f32.mrf.mxu0
      %514 = vmatprep.mubr.f32.mxu0 0.0
      %515 = vmatmul.mubr.f32.gmra.mxu0 %v367
      %v516 = vpop.f32.mrf.mxu0
      %v517 = vadd.f32 %v393, %v516
      %v518 = vpop.f32.mrf.mxu0
      %519 = vmatprep.mubr.f32.mxu0 0.0
      %520 = vmatmul.mubr.f32.gmra.mxu0 %v368
      %v521 = vpop.f32.mrf.mxu0
      %v522 = vadd.f32 %v393, %v521
      %v523 = vpop.f32.mrf.mxu0
      %524 = vmatprep.mubr.f32.mxu0 0.0
      %525 = vmatmul.mubr.f32.gmra.mxu0 %v369
      %v526 = vpop.f32.mrf.mxu0
      %v527 = vadd.f32 %v393, %v526
      %v528 = vpop.f32.mrf.mxu0
      %529 = vmatprep.mubr.f32.mxu0 0.0
      %530 = vmatmul.mubr.f32.gmra.mxu0 %v370
      %v531 = vpop.f32.mrf.mxu0
      %v532 = vadd.f32 %v393, %v531
      %v533 = vpop.f32.mrf.mxu0
      %534 = vmatprep.mubr.f32.mxu0 0.0
      %535 = vmatmul.mubr.f32.gmra.mxu0 %v371
      %v536 = vpop.f32.mrf.mxu0
      %v537 = vadd.f32 %v393, %v536
      %v538 = vpop.f32.mrf.mxu0
      %539 = vdwg.mxu0
      %540 = vst [vmem:[#allocation9] sm:$0xff] %v462
      %541 = vst [vmem:[#allocation9 + $0x8] sm:$0xff] %v467
      %542 = vst [vmem:[#allocation9 + $0x10] sm:$0xff] %v472
      %543 = vst [vmem:[#allocation9 + $0x18] sm:$0xff] %v477
      %544 = vst [vmem:[#allocation9 + $0x20] sm:$0xff] %v482
      %545 = vst [vmem:[#allocation9 + $0x28] sm:$0xff] %v487
      %546 = vst [vmem:[#allocation9 + $0x30] sm:$0xff] %v492
      %547 = vst [vmem:[#allocation9 + $0x38] sm:$0xff] %v497
      %548 = vst [vmem:[#allocation9 + $0x40] sm:$0xff] %v502
      %549 = vst [vmem:[#allocation9 + $0x48] sm:$0xff] %v507
      %550 = vst [vmem:[#allocation9 + $0x50] sm:$0xff] %v512
      %551 = vst [vmem:[#allocation9 + $0x58] sm:$0xff] %v517
      %552 = vst [vmem:[#allocation9 + $0x60] sm:$0xff] %v522
      %553 = vst [vmem:[#allocation9 + $0x68] sm:$0xff] %v527
      %554 = vst [vmem:[#allocation9 + $0x70] sm:$0xff] %v532
      %555 = vst [vmem:[#allocation9 + $0x78] sm:$0xff] %v537
    $region37: #{tpu_custom_call.1} parent=1 // pred_fallthru
      _
    // Predicated region
    $region38: #{tpu_custom_call.1} parent=1 // pred_check
      _
    $region39: #{tpu_custom_call.1} parent=1 // pred_check_branch
      %557 = sbr.rel (0) target = $region41
    $region40: #{tpu_custom_call.1} parent=1 // pred_region
      %s559 = ssub.s32 2048, 2048
      %560 = vsyncadd [#allocation5], %s559
      %s561 = sshll.u32 [#allocation9], 4
      %s562 = int_to_ptr.vmem [resolvable:$true] %s561
      %567 = dma.vmem_to_hbm [thread:$0]  %s562, 2048, %s4, [#allocation5], 128, 128, 8
    $region41: #{tpu_custom_call.1} parent=1 // pred_fallthru
      _
    // Predicated region
    $region42: #{tpu_custom_call.1} parent=1 // pred_check
      _
    $region43: #{tpu_custom_call.1} parent=1 // pred_check_branch
      %569 = sbr.rel (0) target = $region45
    $region44: #{tpu_custom_call.1} parent=1 // pred_region
      %570 = dma.done [#allocation5], 2048
    $region45: #{tpu_custom_call.1} parent=1 // pred_fallthru
      _
    %571 = vsyncpa [#allocation4], 1
    %572 = vsyncpa [#allocation7], 1
    %573 = vsyncpa [#allocation5], 1

</llo_original>
